<compile_context>
chip_gen: v7x
topology: tpu7x:2x2x1
jax: 0.10.0
libtpu: 0.0.40
codegen_flags: <defaults>
</compile_context>

<pallas_src>
import functools

import numpy as np
import jax
import jax.numpy as jnp
from jax import lax
from jax.experimental import pallas as pl
from jax.experimental.pallas import tpu as pltpu


def _l2_normalize(x, eps=1e-12):
    """F.normalize(dim=1) semantics: x / max(||x||_2, eps)."""
    n = jnp.sqrt(jnp.sum(x * x, axis=1, keepdims=True))
    return x / jnp.maximum(n, eps)


def _round_up(x, m):
    return ((x + m - 1) // m) * m


def _vmem_capacity_bytes():
    try:
        return int(pltpu.get_tpu_info().vmem_capacity_bytes)
    except Exception:
        return 64 << 20  # conservative fallback (v7x per-core VMEM)


def _estimate_vmem_bytes(batch, dp, gp, tb, mxu_bytes):
    resident = (2 * 2 * batch * dp * mxu_bytes   # img/txt (pipeline double-buffers)
                + 2 * batch * gp * 4             # one-hot group mask
                + 2 * tb * 128 * 4               # diag block (lane-padded)
                + 2 * 8 * gp * 4)                # output tile
    temps = (6 * tb * batch * 4                  # logits / exp / masked sums (f32)
             + 2 * tb * dp * mxu_bytes           # row-block MXU operand copies
             + 4 * tb * gp * 4)                  # group-sum temporaries
    return resident + temps


def _pick_row_block(batch, dp, gp, mxu_bytes, vmem_budget, requested=None):
    # bf16 packs 2 rows per sublane -> keep row blocks 16-aligned so the
    # in-kernel dynamic row slice of the resident bf16 features is tile-aligned.
    sub_q = 8 * (4 // mxu_bytes)
    if (requested is not None and batch % requested == 0
            and (requested % sub_q == 0 or requested == batch)):
        return requested
    for tb in (512, 256, 128, 64, 32, 16):
        if (tb % sub_q == 0 and batch % tb == 0
                and _estimate_vmem_bytes(batch, dp, gp, tb, mxu_bytes) <= vmem_budget):
            return tb
    for tb in (16, 8):            # smallest aligned divisors, even if over budget
        if tb % sub_q == 0 and batch % tb == 0:
            return tb
    return batch                  # ragged batch: a single row block


def _fair_contrastive_kernel(img_ref, txt_ref, mask_ref, diag_ref, o_ref, *,
                             inv_temperature, block_rows):
    """One independent row block: writes an (8, Gp) partial-sum tile.

    sublane 0, lanes 0/1 : sum over block rows of (lse_all - diag), i2t / t2i
    sublane 1 / 2        : per-group sums of (lse_own_group - diag), i2t / t2i
    """
    i = pl.program_id(0)
    gp = o_ref.shape[1]

    row0 = pl.multiple_of(i * block_rows, block_rows)
    rows = pl.ds(row0, block_rows)

    img_blk = img_ref[rows, :]            # [TB, Dp] mxu dtype (cast once in wrapper)
    txt_blk = txt_ref[rows, :]
    mask_blk = mask_ref[rows, :]          # [TB, Gp] f32 one-hot (padded lanes are 0)
    diag = diag_ref[...]                  # [TB, 1]  exact f32 diagonal logits (already /T)

    img_full = img_ref[...]               # [B, Dp]
    txt_full = txt_ref[...]
    mask_full = mask_ref[...]             # [B, Gp]  f32

    inv_t = jnp.float32(inv_temperature)
    # Guard only: with temperature ~0.07 and cosine-bounded logits the max gap to
    # the global row max is ~28.6 -> exp ~4e-13, far above f32 underflow.  If the
    # temperature ever becomes learnable / much smaller, switch to a per-group max.
    tiny = jnp.float32(1e-30)

    dn_qkt = (((1,), (1,)), ((), ()))     # A @ B.T without materializing a transpose
    dn_std = (((1,), (0,)), ((), ()))     # A @ B

    def one_direction(q_blk, k_full):
        # similarity logits for this row block against ALL columns (MXU, bf16 ok)
        logits = lax.dot_general(q_blk, k_full, dimension_numbers=dn_qkt,
                                 preferred_element_type=jnp.float32) * inv_t   # [TB, B]
        rmax = jnp.max(logits, axis=1, keepdims=True)                          # [TB, 1]
        p = jnp.exp(logits - rmax)                  # single EUP pass, shared by all terms
        lse_all = rmax + jnp.log(jnp.sum(p, axis=1, keepdims=True))            # [TB, 1]
        # per-group denominators in f32 (numerics: tiny exp values), on the MXU
        s_grp = lax.dot_general(p, mask_full, dimension_numbers=dn_std,
                                preferred_element_type=jnp.float32)            # [TB, Gp]
        # one log per ROW: pick the row's own group with the one-hot mask
        s_own = jnp.sum(mask_blk * s_grp, axis=1, keepdims=True)               # [TB, 1]
        lse_own = rmax + jnp.log(jnp.maximum(s_own, tiny))                     # [TB, 1]
        tot = jnp.sum(lse_all - diag, axis=0, keepdims=True)                   # (1, 1)
        gsum = jnp.sum(mask_blk * (lse_own - diag), axis=0, keepdims=True)     # (1, Gp)
        return tot, gsum

    t_i2t, g_i2t = one_direction(img_blk, txt_full)   # image -> text
    t_t2i, g_t2i = one_direction(txt_blk, img_full)   # text  -> image

    # pack the partial sums into one lane-dense (8, Gp) tile, single full store
    sub = lax.broadcasted_iota(jnp.int32, (8, gp), 0)
    lane = lax.broadcasted_iota(jnp.int32, (8, gp), 1)
    tile = (jnp.where((sub == 0) & (lane == 0), t_i2t, 0.0)
            + jnp.where((sub == 0) & (lane == 1), t_t2i, 0.0)
            + jnp.where(sub == 1, g_i2t, 0.0)
            + jnp.where(sub == 2, g_t2i, 0.0))
    o_ref[...] = tile


def fair_contrastive_loss(image_features, text_features, demographics,
                          temperature=0.07, fairness_weight=0.5,
                          block_rows=None, mxu_dtype=jnp.bfloat16):
    """Fair contrastive loss (InfoNCE + within-group + between-group terms).

    The kernel does the O(B^2 * D) work (similarity logits, log-sum-exp, and
    per-group denominators) over independent, parallel row blocks; the one-time
    O(B*D) normalization / diagonal and the tiny O(G*D) finalize run as wrapper
    XLA ops (per the perf review, to keep the grid axis megacore-parallel).
    """
    image_features = jnp.asarray(image_features)
    text_features = jnp.asarray(text_features)
    B, D = image_features.shape
    assert text_features.shape == (B, D)
    mxu_dtype = jnp.dtype(mxu_dtype)
    mxu_bytes = mxu_dtype.itemsize

    # ---- static group structure (demographics is a Python list of strings) ----
    unique = sorted(set(demographics))
    G = len(unique)
    ids = {d: g for g, d in enumerate(unique)}
    mask_np = np.zeros((B, G), np.float32)
    for r, d in enumerate(demographics):
        mask_np[r, ids[d]] = 1.0
    counts_np = mask_np.sum(axis=0)            # every group present has >= 1 member
    valid_np = counts_np >= 2.0                # groups entering the within term
    n_valid = int(valid_np.sum())

    Gp = _round_up(max(G, 2), 128)             # lane-dense mask / output width
    mask_pad_np = np.zeros((B, Gp), np.float32)
    mask_pad_np[:, :G] = mask_np

    # ---- one-time O(B*D) prep in f32 (wrapper) ----
    img_f32 = image_features.astype(jnp.float32)
    txt_f32 = text_features.astype(jnp.float32)
    img_n = _l2_normalize(img_f32)
    txt_n = _l2_normalize(txt_f32)
    diag = (jnp.sum(img_n * txt_n, axis=1, keepdims=True)
            * jnp.float32(1.0 / temperature))                      # exact f32 [B, 1]

    Dp = _round_up(D, 128)                      # full MXU tiles / lane-dense
    if Dp != D:
        pad = ((0, 0), (0, Dp - D))
        img_n = jnp.pad(img_n, pad)
        txt_n = jnp.pad(txt_n, pad)
    img_mxu = img_n.astype(mxu_dtype)           # cast ONCE, not per grid step
    txt_mxu = txt_n.astype(mxu_dtype)
    mask = jnp.asarray(mask_pad_np)             # stays f32 (f32 group matmul)

    # ---- tiling / VMEM budget (generation aware) ----
    vmem_cap = _vmem_capacity_bytes()
    budget = max(32 << 20, vmem_cap - (8 << 20))
    TB = _pick_row_block(B, Dp, Gp, mxu_bytes, budget, block_rows)
    nb = B // TB
    vmem_limit = int(min(budget,
                         max(32 << 20,
                             _estimate_vmem_bytes(B, Dp, Gp, TB, mxu_bytes) + (8 << 20))))

    kernel = functools.partial(_fair_contrastive_kernel,
                               inv_temperature=float(1.0 / temperature),
                               block_rows=TB)

    grid_spec = pltpu.PrefetchScalarGridSpec(
        num_scalar_prefetch=0,
        grid=(nb,),
        in_specs=[
            pl.BlockSpec((B, Dp), lambda i: (0, 0)),   # normalized image feats (resident)
            pl.BlockSpec((B, Dp), lambda i: (0, 0)),   # normalized text  feats (resident)
            pl.BlockSpec((B, Gp), lambda i: (0, 0)),   # one-hot group mask     (resident)
            pl.BlockSpec((TB, 1), lambda i: (i, 0)),   # diagonal logits, row-blocked
        ],
        out_specs=pl.BlockSpec((8, Gp), lambda i: (i, 0)),
    )

    parts = pl.pallas_call(
        kernel,
        out_shape=jax.ShapeDtypeStruct((nb * 8, Gp), jnp.float32),
        grid_spec=grid_spec,
        compiler_params=pltpu.CompilerParams(
            dimension_semantics=("parallel",),      # independent row blocks (v7x 2 TCs)
            vmem_limit_bytes=vmem_limit),
    )(img_mxu, txt_mxu, mask, diag)

    # ---- tiny finalize in plain JAX ----
    parts = parts.reshape(nb, 8, Gp)
    tot_i2t = jnp.sum(parts[:, 0, 0])
    tot_t2i = jnp.sum(parts[:, 0, 1])
    g_i2t = jnp.sum(parts[:, 1, :G], axis=0)        # [G]
    g_t2i = jnp.sum(parts[:, 2, :G], axis=0)        # [G]

    contrastive = 0.5 * (tot_i2t + tot_t2i) / B

    # within-group contrastive (groups with < 2 samples skipped; static structure)
    if n_valid > 0:
        group_loss = 0.5 * (g_i2t + g_t2i) / jnp.asarray(np.maximum(counts_np, 1.0))
        within = jnp.sum(jnp.where(jnp.asarray(valid_np), group_loss, 0.0)) / n_valid
    else:
        within = jnp.float32(0.0)

    # between-group centroid MSE over all group pairs (all present groups non-empty)
    if G >= 2:
        counts_col = jnp.asarray(counts_np)[:, None]
        mask_j = jnp.asarray(mask_np)
        cent_img = _l2_normalize(jnp.einsum('bg,bd->gd', mask_j, img_f32) / counts_col)
        cent_txt = _l2_normalize(jnp.einsum('bg,bd->gd', mask_j, txt_f32) / counts_col)

        def pair_sq_sum(c):
            # sum_{i<j} ||c_i - c_j||^2 = G * sum_i ||c_i||^2 - ||sum_i c_i||^2
            return G * jnp.sum(c * c) - jnp.sum(jnp.sum(c, axis=0) ** 2)

        n_pairs = G * (G - 1) // 2
        between = (pair_sq_sum(cent_img) + pair_sq_sum(cent_txt)) / (2.0 * D * n_pairs)
    else:
        between = jnp.float32(0.0)

    return contrastive + fairness_weight * (within + between)


# ---------------- pure-numpy reference (mirrors the PyTorch module) ----------------
def _reference(img, txt, demographics, temperature=0.07, fairness_weight=0.5):
    img = np.asarray(img, np.float64)
    txt = np.asarray(txt, np.float64)

    def norm(x):
        n = np.sqrt((x * x).sum(axis=1, keepdims=True))
        return x / np.maximum(n, 1e-12)

    def contrastive(i, t):
        i_n, t_n = norm(i), norm(t)
        logits = i_n @ t_n.T / temperature

        def ce(l):
            m = l.max(axis=1, keepdims=True)
            lse = m[:, 0] + np.log(np.exp(l - m).sum(axis=1))
            return float(np.mean(lse - np.diag(l)))

        return 0.5 * (ce(logits) + ce(logits.T))

    total = contrastive(img, txt)
    unique = sorted(set(demographics))
    idx = {d: [i for i, dd in enumerate(demographics) if dd == d] for d in unique}

    within, n_groups = 0.0, 0
    for d in unique:
        ii = idx[d]
        if len(ii) < 2:
            continue
        within += contrastive(img[ii], txt[ii])
        n_groups += 1
    if n_groups > 0:
        within /= n_groups

    between, n_pairs = 0.0, 0
    for a in range(len(unique)):
        ia = idx[unique[a]]
        if not ia:
            continue
        for b in range(a + 1, len(unique)):
            ib = idx[unique[b]]
            if not ib:
                continue
            ca = norm(np.stack([img[ia].mean(0), txt[ia].mean(0)]))
            cb = norm(np.stack([img[ib].mean(0), txt[ib].mean(0)]))
            between += float(np.mean((ca - cb) ** 2))
            n_pairs += 1
    if n_pairs > 0:
        between /= n_pairs

    return total + fairness_weight * (within + between)


if __name__ == "__main__":
    key = jax.random.PRNGKey(0)
    k1, k2 = jax.random.split(key)
    B, D = 32, 32
    image_features = jax.random.normal(k1, (B, D), dtype=jnp.float32)
    text_features = jax.random.normal(k2, (B, D), dtype=jnp.float32)
    # Group "C" has exactly one member: exercises the `< 2 samples` skip path.
    demographics = ["C"] + ["A" if i % 2 == 0 else "B" for i in range(B - 1)]

    # block_rows=16 -> 2 independent row blocks: exercises the parallel
    # partial-sum path (and respects bf16 sublane packing of the row slices).
    loss = fair_contrastive_loss(image_features, text_features, demographics,
                                 block_rows=16)
    loss = jax.block_until_ready(loss)

    ref = _reference(np.asarray(image_features), np.asarray(text_features), demographics)
    assert abs(float(loss) - float(ref)) < 1e-2 * max(1.0, abs(float(ref))), (
        f"mismatch: kernel={float(loss)} ref={float(ref)}")
    print("KERNEL_OK")
</pallas_src>

<mosaic_0001>
module attributes {stable_mosaic.version = 11 : i64} {
  func.func @_fair_contrastive_kernel(%arg0: i32, %arg1: memref<32x128xbf16, #tpu.memory_space<vmem>>, %arg2: memref<32x128xbf16, #tpu.memory_space<vmem>>, %arg3: memref<32x128xf32, #tpu.memory_space<vmem>>, %arg4: memref<16x1xf32, #tpu.memory_space<vmem>>, %arg5: memref<8x128xf32, #tpu.memory_space<vmem>>) attributes {dimension_semantics = [#tpu.dimension_semantics<parallel>], iteration_bounds = array<i64: 2>, scalar_prefetch = 0 : i64, scratch_operands = 0 : i64, tpu.core_type = #tpu.core_type<tc>, window_params = [{pipeline_mode = #tpu.pipeline_mode<synchronous>, transform_indices = @transform_0, window_bounds = array<i64: 32, 128>}, {pipeline_mode = #tpu.pipeline_mode<synchronous>, transform_indices = @transform_1, window_bounds = array<i64: 32, 128>}, {pipeline_mode = #tpu.pipeline_mode<synchronous>, transform_indices = @transform_2, window_bounds = array<i64: 32, 128>}, {transform_indices = @transform_3, window_bounds = array<i64: 16, 1>}, {transform_indices = @transform_4, window_bounds = array<i64: 8, 128>}]} {
    %c16_i32 = arith.constant 16 : i32
    %0 = arith.muli %arg0, %c16_i32 : i32
    %1 = tpu.assume_multiple %0, 16 : i32
    %2 = arith.index_cast %1 : i32 to index
    %c0 = arith.constant 0 : index
    %3 = vector.load %arg1[%2, %c0] : memref<32x128xbf16, #tpu.memory_space<vmem>>, vector<16x128xbf16>
    %4 = arith.index_cast %1 : i32 to index
    %c0_0 = arith.constant 0 : index
    %5 = vector.load %arg2[%4, %c0_0] : memref<32x128xbf16, #tpu.memory_space<vmem>>, vector<16x128xbf16>
    %6 = arith.index_cast %1 : i32 to index
    %c0_1 = arith.constant 0 : index
    %7 = vector.load %arg3[%6, %c0_1] : memref<32x128xf32, #tpu.memory_space<vmem>>, vector<16x128xf32>
    %c0_2 = arith.constant 0 : index
    %c0_3 = arith.constant 0 : index
    %8 = vector.load %arg4[%c0_2, %c0_3] : memref<16x1xf32, #tpu.memory_space<vmem>>, vector<16x1xf32>
    %c0_4 = arith.constant 0 : index
    %c0_5 = arith.constant 0 : index
    %9 = vector.load %arg1[%c0_4, %c0_5] : memref<32x128xbf16, #tpu.memory_space<vmem>>, vector<32x128xbf16>
    %c0_6 = arith.constant 0 : index
    %c0_7 = arith.constant 0 : index
    %10 = vector.load %arg2[%c0_6, %c0_7] : memref<32x128xbf16, #tpu.memory_space<vmem>>, vector<32x128xbf16>
    %c0_8 = arith.constant 0 : index
    %c0_9 = arith.constant 0 : index
    %11 = vector.load %arg3[%c0_8, %c0_9] : memref<32x128xf32, #tpu.memory_space<vmem>>, vector<32x128xf32>
    %cst = arith.constant dense<0.000000e+00> : vector<16x32xf32>
    %12 = tpu.matmul %3, %10, %cst {dimension_numbers = #tpu.dot_dimension_numbers<[1], [1], [0], [0], [0, 0, 1, 0], [], []>} : vector<16x128xbf16>, vector<32x128xbf16>, vector<16x32xf32> -> vector<16x32xf32>
    %cst_10 = arith.constant 14.2857141 : f32
    %13 = vector.broadcast %cst_10 : f32 to vector<16x32xf32>
    %14 = arith.mulf %12, %13 : vector<16x32xf32>
    %cst_11 = arith.constant dense<0xFF800000> : vector<16xf32>
    %15 = vector.multi_reduction <maximumf>, %14, %cst_11 [1] : vector<16x32xf32> to vector<16xf32>
    %16 = vector.shape_cast %15 : vector<16xf32> to vector<16x1xf32>
    %17 = vector.broadcast %16 : vector<16x1xf32> to vector<16x32xf32>
    %18 = arith.subf %14, %17 : vector<16x32xf32>
    %19 = math.exp %18 : vector<16x32xf32>
    %cst_12 = arith.constant dense<0.000000e+00> : vector<16xf32>
    %20 = vector.multi_reduction <add>, %19, %cst_12 [1] : vector<16x32xf32> to vector<16xf32>
    %21 = vector.shape_cast %20 : vector<16xf32> to vector<16x1xf32>
    %22 = math.log %21 : vector<16x1xf32>
    %23 = arith.addf %16, %22 : vector<16x1xf32>
    %cst_13 = arith.constant dense<0.000000e+00> : vector<16x128xf32>
    %24 = tpu.matmul %19, %11, %cst_13 {dimension_numbers = #tpu.dot_dimension_numbers<[1], [0], [0], [1], [0, 0, 1, 1], [], []>} : vector<16x32xf32>, vector<32x128xf32>, vector<16x128xf32> -> vector<16x128xf32>
    %25 = arith.mulf %7, %24 : vector<16x128xf32>
    %cst_14 = arith.constant dense<0.000000e+00> : vector<16xf32>
    %26 = vector.multi_reduction <add>, %25, %cst_14 [1] : vector<16x128xf32> to vector<16xf32>
    %27 = vector.shape_cast %26 : vector<16xf32> to vector<16x1xf32>
    %cst_15 = arith.constant 1.000000e-30 : f32
    %28 = vector.broadcast %cst_15 : f32 to vector<16x1xf32>
    %29 = arith.maximumf %27, %28 : vector<16x1xf32>
    %30 = math.log %29 : vector<16x1xf32>
    %31 = arith.addf %16, %30 : vector<16x1xf32>
    %32 = arith.subf %23, %8 : vector<16x1xf32>
    %cst_16 = arith.constant dense<0.000000e+00> : vector<1xf32>
    %33 = vector.multi_reduction <add>, %32, %cst_16 [0] : vector<16x1xf32> to vector<1xf32>
    %34 = vector.shape_cast %33 : vector<1xf32> to vector<1x1xf32>
    %35 = arith.subf %31, %8 : vector<16x1xf32>
    %36 = vector.broadcast %35 : vector<16x1xf32> to vector<16x128xf32>
    %37 = arith.mulf %7, %36 : vector<16x128xf32>
    %cst_17 = arith.constant dense<0.000000e+00> : vector<128xf32>
    %38 = vector.multi_reduction <add>, %37, %cst_17 [0] : vector<16x128xf32> to vector<128xf32>
    %39 = vector.shape_cast %38 : vector<128xf32> to vector<1x128xf32>
    %cst_18 = arith.constant dense<0.000000e+00> : vector<16x32xf32>
    %40 = tpu.matmul %5, %9, %cst_18 {dimension_numbers = #tpu.dot_dimension_numbers<[1], [1], [0], [0], [0, 0, 1, 0], [], []>} : vector<16x128xbf16>, vector<32x128xbf16>, vector<16x32xf32> -> vector<16x32xf32>
    %cst_19 = arith.constant 14.2857141 : f32
    %41 = vector.broadcast %cst_19 : f32 to vector<16x32xf32>
    %42 = arith.mulf %40, %41 : vector<16x32xf32>
    %cst_20 = arith.constant dense<0xFF800000> : vector<16xf32>
    %43 = vector.multi_reduction <maximumf>, %42, %cst_20 [1] : vector<16x32xf32> to vector<16xf32>
    %44 = vector.shape_cast %43 : vector<16xf32> to vector<16x1xf32>
    %45 = vector.broadcast %44 : vector<16x1xf32> to vector<16x32xf32>
    %46 = arith.subf %42, %45 : vector<16x32xf32>
    %47 = math.exp %46 : vector<16x32xf32>
    %cst_21 = arith.constant dense<0.000000e+00> : vector<16xf32>
    %48 = vector.multi_reduction <add>, %47, %cst_21 [1] : vector<16x32xf32> to vector<16xf32>
    %49 = vector.shape_cast %48 : vector<16xf32> to vector<16x1xf32>
    %50 = math.log %49 : vector<16x1xf32>
    %51 = arith.addf %44, %50 : vector<16x1xf32>
    %cst_22 = arith.constant dense<0.000000e+00> : vector<16x128xf32>
    %52 = tpu.matmul %47, %11, %cst_22 {dimension_numbers = #tpu.dot_dimension_numbers<[1], [0], [0], [1], [0, 0, 1, 1], [], []>} : vector<16x32xf32>, vector<32x128xf32>, vector<16x128xf32> -> vector<16x128xf32>
    %53 = arith.mulf %7, %52 : vector<16x128xf32>
    %cst_23 = arith.constant dense<0.000000e+00> : vector<16xf32>
    %54 = vector.multi_reduction <add>, %53, %cst_23 [1] : vector<16x128xf32> to vector<16xf32>
    %55 = vector.shape_cast %54 : vector<16xf32> to vector<16x1xf32>
    %cst_24 = arith.constant 1.000000e-30 : f32
    %56 = vector.broadcast %cst_24 : f32 to vector<16x1xf32>
    %57 = arith.maximumf %55, %56 : vector<16x1xf32>
    %58 = math.log %57 : vector<16x1xf32>
    %59 = arith.addf %44, %58 : vector<16x1xf32>
    %60 = arith.subf %51, %8 : vector<16x1xf32>
    %cst_25 = arith.constant dense<0.000000e+00> : vector<1xf32>
    %61 = vector.multi_reduction <add>, %60, %cst_25 [0] : vector<16x1xf32> to vector<1xf32>
    %62 = vector.shape_cast %61 : vector<1xf32> to vector<1x1xf32>
    %63 = arith.subf %59, %8 : vector<16x1xf32>
    %64 = vector.broadcast %63 : vector<16x1xf32> to vector<16x128xf32>
    %65 = arith.mulf %7, %64 : vector<16x128xf32>
    %cst_26 = arith.constant dense<0.000000e+00> : vector<128xf32>
    %66 = vector.multi_reduction <add>, %65, %cst_26 [0] : vector<16x128xf32> to vector<128xf32>
    %67 = vector.shape_cast %66 : vector<128xf32> to vector<1x128xf32>
    %68 = tpu.iota {dimensions = array<i32: 0>} : vector<8x128xi32>
    %69 = tpu.iota {dimensions = array<i32: 1>} : vector<8x128xi32>
    %c0_i32 = arith.constant 0 : i32
    %70 = vector.broadcast %c0_i32 : i32 to vector<8x128xi32>
    %71 = arith.cmpi eq, %68, %70 : vector<8x128xi32>
    %c0_i32_27 = arith.constant 0 : i32
    %72 = vector.broadcast %c0_i32_27 : i32 to vector<8x128xi32>
    %73 = arith.cmpi eq, %69, %72 : vector<8x128xi32>
    %74 = arith.andi %71, %73 : vector<8x128xi1>
    %cst_28 = arith.constant 0.000000e+00 : f32
    %75 = vector.shape_cast %34 : vector<1x1xf32> to vector<1x1xf32>
    %76 = vector.broadcast %75 : vector<1x1xf32> to vector<8x128xf32>
    %77 = vector.broadcast %cst_28 : f32 to vector<8x128xf32>
    %78 = arith.select %74, %76, %77 : vector<8x128xi1>, vector<8x128xf32>
    %c0_i32_29 = arith.constant 0 : i32
    %79 = vector.broadcast %c0_i32_29 : i32 to vector<8x128xi32>
    %80 = arith.cmpi eq, %68, %79 : vector<8x128xi32>
    %c1_i32 = arith.constant 1 : i32
    %81 = vector.broadcast %c1_i32 : i32 to vector<8x128xi32>
    %82 = arith.cmpi eq, %69, %81 : vector<8x128xi32>
    %83 = arith.andi %80, %82 : vector<8x128xi1>
    %cst_30 = arith.constant 0.000000e+00 : f32
    %84 = vector.shape_cast %62 : vector<1x1xf32> to vector<1x1xf32>
    %85 = vector.broadcast %84 : vector<1x1xf32> to vector<8x128xf32>
    %86 = vector.broadcast %cst_30 : f32 to vector<8x128xf32>
    %87 = arith.select %83, %85, %86 : vector<8x128xi1>, vector<8x128xf32>
    %88 = arith.addf %78, %87 : vector<8x128xf32>
    %c1_i32_31 = arith.constant 1 : i32
    %89 = vector.broadcast %c1_i32_31 : i32 to vector<8x128xi32>
    %90 = arith.cmpi eq, %68, %89 : vector<8x128xi32>
    %cst_32 = arith.constant 0.000000e+00 : f32
    %91 = vector.shape_cast %39 : vector<1x128xf32> to vector<1x128xf32>
    %92 = vector.broadcast %91 : vector<1x128xf32> to vector<8x128xf32>
    %93 = vector.broadcast %cst_32 : f32 to vector<8x128xf32>
    %94 = arith.select %90, %92, %93 : vector<8x128xi1>, vector<8x128xf32>
    %95 = arith.addf %88, %94 : vector<8x128xf32>
    %c2_i32 = arith.constant 2 : i32
    %96 = vector.broadcast %c2_i32 : i32 to vector<8x128xi32>
    %97 = arith.cmpi eq, %68, %96 : vector<8x128xi32>
    %cst_33 = arith.constant 0.000000e+00 : f32
    %98 = vector.shape_cast %67 : vector<1x128xf32> to vector<1x128xf32>
    %99 = vector.broadcast %98 : vector<1x128xf32> to vector<8x128xf32>
    %100 = vector.broadcast %cst_33 : f32 to vector<8x128xf32>
    %101 = arith.select %97, %99, %100 : vector<8x128xi1>, vector<8x128xf32>
    %102 = arith.addf %95, %101 : vector<8x128xf32>
    %c0_34 = arith.constant 0 : index
    %c0_35 = arith.constant 0 : index
    %103 = vector.load %arg5[%c0_34, %c0_35] : memref<8x128xf32, #tpu.memory_space<vmem>>, vector<8x128xf32>
    tpu.vector_store %arg5[%c0_34, %c0_35], %102 {strides = array<i32>} : memref<8x128xf32, #tpu.memory_space<vmem>>, vector<8x128xf32>,
    return
  }
  func.func @transform_0(%arg0: i32) -> (i32, i32) {
    %c0_i32 = arith.constant 0 : i32
    %c0_i32_0 = arith.constant 0 : i32
    %c0_i32_1 = arith.constant 0 : i32
    return %c0_i32, %c0_i32_0 : i32, i32
  }
  func.func @transform_1(%arg0: i32) -> (i32, i32) {
    %c0_i32 = arith.constant 0 : i32
    %c0_i32_0 = arith.constant 0 : i32
    %c0_i32_1 = arith.constant 0 : i32
    return %c0_i32, %c0_i32_0 : i32, i32
  }
  func.func @transform_2(%arg0: i32) -> (i32, i32) {
    %c0_i32 = arith.constant 0 : i32
    %c0_i32_0 = arith.constant 0 : i32
    %c0_i32_1 = arith.constant 0 : i32
    return %c0_i32, %c0_i32_0 : i32, i32
  }
  func.func @transform_3(%arg0: i32) -> (i32, i32) {
    %c0_i32 = arith.constant 0 : i32
    %c0_i32_0 = arith.constant 0 : i32
    return %arg0, %c0_i32 : i32, i32
  }
  func.func @transform_4(%arg0: i32) -> (i32, i32) {
    %c0_i32 = arith.constant 0 : i32
    %c0_i32_0 = arith.constant 0 : i32
    return %arg0, %c0_i32 : i32, i32
  }
}

</mosaic_0001>

<llo_original>
// kernel: tpu_custom_call.1
$region0: #{tpu_custom_call.1}
  #allocation0 [shape = 'u32[]', space=smem, size = 0x4, offset = 0x4, fixed_abs, tag = 'smem constant byte address 0x4 - core index']
  #allocation1 [shape = 'u32[144,128]{1,0:T(1,128)}', space=vmem, size = 0x12000, scoped, tag = 'internal scratch']
  %s0 = inlined_call_operand.hbm [shape: bf16[32,128], index: 0, kind: input, shape index: {}]
  %s1 = inlined_call_operand.hbm [shape: bf16[32,128], index: 1, kind: input, shape index: {}]
  %s2 = inlined_call_operand.vmem [shape: f32[32,128], index: 2, kind: input, shape index: {}]
  %s3 = inlined_call_operand.vmem [shape: f32[32,1], index: 3, kind: input, shape index: {}]
  %s4 = inlined_call_operand.hbm [shape: f32[16,128], index: 4, kind: output, shape index: {}]
  %s5 = sld [smem:[#allocation0]]
  $region57: #{tpu_custom_call.1} parent=0
    _
  %s7 = ssub.s32 1, %s5
  %s8 = scalar_select 0, %s7, %s5
  $region1: #{tpu_custom_call.1} parent=0
    #allocation2 [shape = 'u8[8192]{0}', space=vmem, size = 0x2000, scoped, tag = 'input window, operand 0, single buffered']
    #allocation3 [shape = 's32[2]{0}', space=sflag, size = 0x8, scoped, tag = 'scoped memory for tpu_custom_call.1']
    #allocation4 [shape = 's32[2]{0}', space=sflag, size = 0x8, scoped, tag = 'scoped memory for tpu_custom_call.1']
    #allocation5 [shape = 'u8[8192]{0}', space=vmem, size = 0x2000, scoped, tag = 'input window, operand 1, single buffered']
    #allocation6 [shape = 's32[1]{0}', space=sflag, size = 0x4, scoped, tag = 'scoped memory for tpu_custom_call.1']
    #allocation7 [shape = 'u8[8192]{0}', space=vmem, size = 0x2000, scoped, tag = 'output window, operand 0']
    %9 = vsyncpa [#allocation3], 0
    %10 = vsyncpa [#allocation6], 0
    %11 = vsyncpa [#allocation4], 0
    %s12 = scalar_lea.sflag [#allocation4], 1
    %13 = vsyncpa %s12, 0
    loop: start=0, step=1, limit=4
    $region2: #{tpu_custom_call.1} parent=1 // loop_pre_header
      _
    $region3: #{tpu_custom_call.1} parent=1 // loop_header
      %s15 = sphi 0, %s19
      %p16 = scmp.ge.s32.totalorder %s15, 4
      %s23 = sphi 0, %s23
      %s25 = sphi 0, %s23
      %s26 = sphi 0, %s25
      %s40 = sphi 0, %s26
      %s44 = sphi 0, %s44
      %s46 = sphi 0, %s44
      %s47 = sphi 0, %s46
      %s61 = sphi 0, %s47
      %s65 = sphi 0, %s65
      %s67 = sphi 0, %s65
      %s68 = sphi 0, %s67
      %s82 = sphi 0, %s68
      %s88 = sphi 0, %s90
      %s91 = sphi 0, %s88
      %s92 = sphi 0, %s91
      %s108 = sphi 0, %s92
      %s114 = sphi 0, %s116
      %s117 = sphi 0, %s114
      %s118 = sphi 0, %s117
      %s134 = sphi 0, %s118
    $region4: #{tpu_custom_call.1} parent=1 // loop_header_branch
      %18 = sbr.rel (%p16) target = $region8
    $region5: #{tpu_custom_call.1} parent=1 // loop_body
      %s20 = ssub.s32 %s15, 1
      %s21 = ssub.s32 %s15, 2
      %s22 = sadd.s32 %s15, 1
      %s24 = sadd.s32 %s23, 1
      %p27 = scmp.eq.s32.totalorder %s15, 1
      %p28 = scmp.ne.s32.totalorder %s23, %s25
      %p29 = scmp.eq.s32.totalorder %s15, 0
      %p30 = por %p28, %p29
      %p31 = scmp.ne.s32.totalorder %s23, %s25
      %p32 = scmp.eq.s32.totalorder %s20, 1
      %p33 = por %p31, %p32
      %p34 = scmp.ne.s32.totalorder %s25, %s26
      %p35 = scmp.eq.s32.totalorder %s20, 0
      %p36 = por %p34, %p35
      %p37 = scmp.ne.s32.totalorder %s25, %s26
      %p38 = scmp.eq.s32.totalorder %s21, 1
      %p39 = por %p37, %p38
      %p41 = scmp.ne.s32.totalorder %s26, %s40
      %p42 = scmp.eq.s32.totalorder %s21, 0
      %p43 = por %p41, %p42
      %s45 = sadd.s32 %s44, 1
      %p48 = scmp.eq.s32.totalorder %s15, 1
      %p49 = scmp.ne.s32.totalorder %s44, %s46
      %p50 = scmp.eq.s32.totalorder %s15, 0
      %p51 = por %p49, %p50
      %p52 = scmp.ne.s32.totalorder %s44, %s46
      %p53 = scmp.eq.s32.totalorder %s20, 1
      %p54 = por %p52, %p53
      %p55 = scmp.ne.s32.totalorder %s46, %s47
      %p56 = scmp.eq.s32.totalorder %s20, 0
      %p57 = por %p55, %p56
      %p58 = scmp.ne.s32.totalorder %s46, %s47
      %p59 = scmp.eq.s32.totalorder %s21, 1
      %p60 = por %p58, %p59
      %p62 = scmp.ne.s32.totalorder %s47, %s61
      %p63 = scmp.eq.s32.totalorder %s21, 0
      %p64 = por %p62, %p63
      %s66 = sadd.s32 %s65, 1
      %p69 = scmp.eq.s32.totalorder %s15, 1
      %p70 = scmp.ne.s32.totalorder %s65, %s67
      %p71 = scmp.eq.s32.totalorder %s15, 0
      %p72 = por %p70, %p71
      %p73 = scmp.ne.s32.totalorder %s65, %s67
      %p74 = scmp.eq.s32.totalorder %s20, 1
      %p75 = por %p73, %p74
      %p76 = scmp.ne.s32.totalorder %s67, %s68
      %p77 = scmp.eq.s32.totalorder %s20, 0
      %p78 = por %p76, %p77
      %p79 = scmp.ne.s32.totalorder %s67, %s68
      %p80 = scmp.eq.s32.totalorder %s21, 1
      %p81 = por %p79, %p80
      %p83 = scmp.ne.s32.totalorder %s68, %s82
      %p84 = scmp.eq.s32.totalorder %s21, 0
      %p85 = por %p83, %p84
      %s86 = ssub.s32 %s15, %s22
      %p87 = scmp.eq.s32.totalorder %s86, 0
      %s89 = sadd.s32 %s88, 1
      %s90 = scalar_select %p87, %s88, %s89
      %p93 = pneg %p87
      %p94 = scmp.eq.s32.totalorder %s15, 1
      %p95 = por %p93, %p94
      %p96 = scmp.ne.s32.totalorder %s88, %s91
      %p97 = scmp.eq.s32.totalorder %s15, 0
      %p98 = por %p96, %p97
      %p99 = scmp.ne.s32.totalorder %s88, %s91
      %p100 = scmp.eq.s32.totalorder %s20, 1
      %p101 = por %p99, %p100
      %p102 = scmp.ne.s32.totalorder %s91, %s92
      %p103 = scmp.eq.s32.totalorder %s20, 0
      %p104 = por %p102, %p103
      %p105 = scmp.ne.s32.totalorder %s91, %s92
      %p106 = scmp.eq.s32.totalorder %s21, 1
      %p107 = por %p105, %p106
      %p109 = scmp.ne.s32.totalorder %s92, %s108
      %p110 = scmp.eq.s32.totalorder %s21, 0
      %p111 = por %p109, %p110
      %s112 = ssub.s32 %s15, %s22
      %p113 = scmp.eq.s32.totalorder %s112, 0
      %s115 = sadd.s32 %s114, 1
      %s116 = scalar_select %p113, %s114, %s115
      %p119 = pneg %p113
      %p120 = scmp.eq.s32.totalorder %s15, 1
      %p121 = por %p119, %p120
      %p122 = scmp.ne.s32.totalorder %s114, %s117
      %p123 = scmp.eq.s32.totalorder %s15, 0
      %p124 = por %p122, %p123
      %p125 = scmp.ne.s32.totalorder %s114, %s117
      %p126 = scmp.eq.s32.totalorder %s20, 1
      %p127 = por %p125, %p126
      %p128 = scmp.ne.s32.totalorder %s117, %s118
      %p129 = scmp.eq.s32.totalorder %s20, 0
      %p130 = por %p128, %p129
      %p131 = scmp.ne.s32.totalorder %s117, %s118
      %p132 = scmp.eq.s32.totalorder %s21, 1
      %p133 = por %p131, %p132
      %p135 = scmp.ne.s32.totalorder %s118, %s134
      %p136 = scmp.eq.s32.totalorder %s21, 0
      %p137 = por %p135, %p136
      %p138 = scmp.le.s32.totalorder 1, %s15
      %p139 = scmp.lt.s32.totalorder %s15, 3
      %p140 = pnand %p138, %p139
      %p141 = pneg %p140
      // Predicated region
      $region9: #{tpu_custom_call.1} parent=5 // pred_check
        _
      $region10: #{tpu_custom_call.1} parent=5 // pred_check_branch
        %143 = sbr.rel (%p140) target = $region12
      $region11: #{tpu_custom_call.1} parent=5 // pred_region
        %s144 = ssub.s32 %s15, 1
        // Predicated region
        $region13: #{tpu_custom_call.1} parent=11 // pred_check
          %p145 = pneg %p36
        $region14: #{tpu_custom_call.1} parent=11 // pred_check_branch
          %147 = sbr.rel (%p145) target = $region16
        $region15: #{tpu_custom_call.1} parent=11 // pred_region
          %s149 = ssub.s32 256, 256
          %150 = vsyncadd [#allocation3], %s149
          %s151 = sshll.u32 [#allocation2], 4
          %s152 = int_to_ptr.vmem [resolvable:$true] %s151
          %157 = dma.hbm_to_vmem [thread:$0]  %s0, 256, %s152, [#allocation3], 64, 64, 4
        $region16: #{tpu_custom_call.1} parent=11 // pred_fallthru
          _
        // Predicated region
        $region17: #{tpu_custom_call.1} parent=11 // pred_check
          %p158 = pneg %p57
        $region18: #{tpu_custom_call.1} parent=11 // pred_check_branch
          %160 = sbr.rel (%p158) target = $region20
        $region19: #{tpu_custom_call.1} parent=11 // pred_region
          %s162 = ssub.s32 256, 256
          %163 = vsyncadd [#allocation6], %s162
          %s164 = sshll.u32 [#allocation5], 4
          %s165 = int_to_ptr.vmem [resolvable:$true] %s164
          %170 = dma.hbm_to_vmem [thread:$0]  %s1, 256, %s165, [#allocation6], 64, 64, 4
        $region20: #{tpu_custom_call.1} parent=11 // pred_fallthru
          _
        // Predicated region
        $region21: #{tpu_custom_call.1} parent=11 // pred_check
          %p171 = pneg %p78
        $region22: #{tpu_custom_call.1} parent=11 // pred_check_branch
          %173 = sbr.rel (%p171) target = $region24
        $region23: #{tpu_custom_call.1} parent=11 // pred_region
          _
        $region24: #{tpu_custom_call.1} parent=11 // pred_fallthru
          _
      $region12: #{tpu_custom_call.1} parent=5 // pred_fallthru
        _
      %p174 = scmp.lt.s32.totalorder %s15, 2
      // Predicated region
      $region25: #{tpu_custom_call.1} parent=5 // pred_check
        %p175 = pneg %p174
      $region26: #{tpu_custom_call.1} parent=5 // pred_check_branch
        %177 = sbr.rel (%p175) target = $region28
      $region27: #{tpu_custom_call.1} parent=5 // pred_region
        // Predicated region
        $region29: #{tpu_custom_call.1} parent=27 // pred_check
          %p178 = pneg %p98
        $region30: #{tpu_custom_call.1} parent=27 // pred_check_branch
          %180 = sbr.rel (%p178) target = $region32
        $region31: #{tpu_custom_call.1} parent=27 // pred_region
          %s181 = smul.u32 2, %s15
          %p182 = scmp.lt.s32.totalorder %s181, 3
          %s183 = scalar_select %p182, %s181, 3
          %s184 = smul.addr %s183, 8
          %s185 = scalar_lea.vmem %s3, %s184
          %s186 = smul.u32 2, %s15
        $region32: #{tpu_custom_call.1} parent=27 // pred_fallthru
          _
      $region28: #{tpu_custom_call.1} parent=5 // pred_fallthru
        _
      %p187 = scmp.le.s32.totalorder 1, %s15
      %p188 = scmp.lt.s32.totalorder %s15, 3
      %p189 = pnand %p187, %p188
      %p190 = pneg %p189
      // Predicated region
      $region33: #{tpu_custom_call.1} parent=5 // pred_check
        _
      $region34: #{tpu_custom_call.1} parent=5 // pred_check_branch
        %192 = sbr.rel (%p189) target = $region36
      $region35: #{tpu_custom_call.1} parent=5 // pred_region
        %s193 = ssub.s32 %s15, 1
        // Predicated region
        $region37: #{tpu_custom_call.1} parent=35 // pred_check
          %p194 = pneg %p36
        $region38: #{tpu_custom_call.1} parent=35 // pred_check_branch
          %196 = sbr.rel (%p194) target = $region40
        $region39: #{tpu_custom_call.1} parent=35 // pred_region
          %197 = dma.done [#allocation3], 256
        $region40: #{tpu_custom_call.1} parent=35 // pred_fallthru
          _
        // Predicated region
        $region41: #{tpu_custom_call.1} parent=35 // pred_check
          %p198 = pneg %p57
        $region42: #{tpu_custom_call.1} parent=35 // pred_check_branch
          %200 = sbr.rel (%p198) target = $region44
        $region43: #{tpu_custom_call.1} parent=35 // pred_region
          %201 = dma.done [#allocation6], 256
        $region44: #{tpu_custom_call.1} parent=35 // pred_fallthru
          _
        %p202 = pneg %p36
        %p203 = pneg %p33
        %p204 = pneg %p57
        %p205 = pneg %p54
        %p206 = pneg %p78
        %p207 = pneg %p75
        %s208 = smul.u32 2, %s20
        %p209 = scmp.lt.s32.totalorder %s208, 3
        %s210 = scalar_select %p209, %s208, 3
        %s211 = smul.addr %s210, 8
        %s212 = scalar_lea.vmem %s3, %s211
        %p213 = pneg %p104
        %p214 = pneg %p101
        %p215 = pneg %p130
        %p216 = pneg %p127
        %s217 = sand.u32 %s117, 1
        %s218 = scalar_lea.sflag [#allocation4], %s217
        %s219 = sand.u32 %s117, 1
        %s220 = smul.addr %s219, 8
        %s221 = scalar_lea.vmem [#allocation7], %s220
        %s222 = smul.u32 2, %s20
        %p223 = scmp.lt.s32.totalorder %s222, 3
        %s224 = scalar_select %p223, %s222, 3
        %s225 = smul.addr %s224, 8
        %s226 = scalar_lea.vmem %s3, %s225
        %s227 = smul.u32 2, %s20
        %s229 = smul.u32 %s20, 16
        %s230 = sshra.s32 %s229, 3
        %s231 = sand.u32 %s229, 7
        %s232 = smul.addr %s230, 4
        %s233 = scalar_lea.vmem [#allocation2], %s232
        %v234 = vld [vmem:[%s233] sm:$0xf]
        %v235 = vld [vmem:[%s233 + $0x4] sm:$0xf]
        %s236 = smul.addr %s230, 4
        %s237 = scalar_lea.vmem [#allocation5], %s236
        %v238 = vld [vmem:[%s237] sm:$0xf]
        %v239 = vld [vmem:[%s237 + $0x4] sm:$0xf]
        %s240 = scalar_lea.vmem %s2, %s229
        %v241 = vld [vmem:[%s240] sm:$0xff]
        %v242 = vld [vmem:[%s240 + $0x8] sm:$0xff]
        %v243 = vld [vmem:[%s226] sm:$0xff]
        %v244 = vld [vmem:[%s226 + $0x8] sm:$0xff]
        %v245 = vld [vmem:[#allocation2] sm:$0xf]
        %v246 = vld [vmem:[#allocation2 + $0x4] sm:$0xf]
        %v247 = vld [vmem:[#allocation2 + $0x8] sm:$0xf]
        %v248 = vld [vmem:[#allocation2 + $0xc] sm:$0xf]
        %v249 = vld [vmem:[#allocation5] sm:$0xf]
        %v250 = vld [vmem:[#allocation5 + $0x4] sm:$0xf]
        %v251 = vld [vmem:[#allocation5 + $0x8] sm:$0xf]
        %v252 = vld [vmem:[#allocation5 + $0xc] sm:$0xf]
        %v253 = vld [vmem:[%s2] sm:$0xff]
        %v254 = vld [vmem:[%s2 + $0x8] sm:$0xff]
        %v255 = vld [vmem:[%s2 + $0x10] sm:$0xff]
        %v256 = vld [vmem:[%s2 + $0x18] sm:$0xff]
        %v259 = vunpack.c.l.b16 %v234
        %v260 = vunpack.c.l.b16 %v235
        %v261 = vpack.c.b16 %v260, %v259
        %v267 = vunpack.c.l.b16 %v249
        %v268 = vunpack.c.l.b16 %v250
        %v269 = vunpack.c.l.b16 %v251
        %v270 = vunpack.c.l.b16 %v252
        %v271 = vpack.c.b16 %v268, %v267
        %v272 = vpack.c.b16 %v270, %v269
        %275 = vmatprep.subr.bf16.mxu0 0
        %276 = vmatpush1.bf16.xpose.msra.mxu0 %v271
        %277 = vmatprep.subr.bf16.mxu0 0
        %278 = vmatpush1.bf16.xpose.msra.mxu0 %v272
        %279 = vmatprep.subr.bf16.mxu0 0
        %280 = vmatpush1.bf16.xpose.msra.mxu0 0
        %281 = vmatprep.subr.bf16.mxu0 0
        %282 = vmatpush1.bf16.xpose.msra.mxu0 0
        %283 = vmatprep.subr.bf16.mxu0 0
        %284 = vmatpush1.bf16.xpose.msra.mxu0 0
        %285 = vmatprep.subr.bf16.mxu0 0
        %286 = vmatpush1.bf16.xpose.msra.mxu0 0
        %287 = vmatprep.subr.bf16.mxu0 0
        %288 = vmatpush1.bf16.xpose.msra.mxu0 0
        %289 = vmatprep.subr.bf16.mxu0 0
        %290 = vmatpush1.bf16.xpose.msra.mxu0 0
        %291 = vmatprep.subr.bf16.mxu0 0
        %292 = vmatpush1.bf16.xpose.msra.mxu0 0
        %293 = vmatprep.subr.bf16.mxu0 0
        %294 = vmatpush1.bf16.xpose.msra.mxu0 0
        %295 = vmatprep.subr.bf16.mxu0 0
        %296 = vmatpush1.bf16.xpose.msra.mxu0 0
        %297 = vmatprep.subr.bf16.mxu0 0
        %298 = vmatpush1.bf16.xpose.msra.mxu0 0
        %299 = vmatprep.subr.bf16.mxu0 0
        %300 = vmatpush1.bf16.xpose.msra.mxu0 0
        %301 = vmatprep.subr.bf16.mxu0 0
        %302 = vmatpush1.bf16.xpose.msra.mxu0 0
        %303 = vmatprep.subr.bf16.mxu0 0
        %304 = vmatpush1.bf16.xpose.msra.mxu0 0
        %305 = vmatprep.subr.bf16.mxu0 0
        %306 = vmatpush1.bf16.xpose.msra.mxu0 0
        %307 = vmatprep.mubr.bf16.mxu0 0
        %308 = vmatmul.mubr.bf16.gmra.mrb[0].mxu0 %v261
        %v309 = vpop.f32.mrb[0].mxu0
        %v310 = vadd.f32 0.0, %v309
        %v311 = vpop.f32.mrb[0].mxu0
        %v312 = vpop.f32.mrb[0].mxu0
        %v313 = vadd.f32 0.0, %v312
        %v314 = vpop.f32.mrb[0].mxu0
        %315 = vdwg.mxu0
        %v316 = vmul.f32 %v310, 14.285714
        %v317 = vmul.f32 %v313, 14.285714
        %vm318 = vcmask 261120
        %v319 = vsel %vm318, %v316, -inf
        %320 = vmax.xlane.f32.xlu0 %v319
        %v321 = vpop.xlane.xlu0 %320
        %v322 = vsel %vm318, %v317, -inf
        %323 = vmax.xlane.f32.xlu0 %v322
        %v324 = vpop.xlane.xlu0 %323
        %v325 = vsub.f32 %v316, %v321
        %v326 = vsub.f32 %v317, %v324
        %v327 = vmul.f32 %v325, 1.442695
        %v328 = vpow.pop %v327
        %v329 = vmul.f32 %v326, 1.442695
        %v330 = vpow.pop %v329
        %v331 = vsel %vm318, %v328, 0.0
        %332 = vadd.xlane.f32.xlu0 %v331
        %v333 = vpop.xlane.xlu0 %332
        %v334 = vsel %vm318, %v330, 0.0
        %335 = vadd.xlane.f32.xlu0 %v334
        %v336 = vpop.xlane.xlu0 %335
        %v337 = vlog2.pop %v333
        %v338 = vmul.f32 %v337, 0.6931472
        %v339 = vlog2.pop %v336
        %v340 = vmul.f32 %v339, 0.6931472
        %v341 = vadd.f32 %v321, %v338
        %v342 = vadd.f32 %v324, %v340
        %v344 = vsel %vm318, %v328, 0
        %v347 = vsel %vm318, %v330, 0
        %349 = vmatprep.subr.mxu0 0.0
        %350 = vmatpush1.msra.mxu0 %v253
        %351 = vmatprep.subr.mxu0 0.0
        %352 = vmatpush1.msra.mxu0 %v254
        %353 = vmatprep.subr.mxu0 0.0
        %354 = vmatpush1.msra.mxu0 %v255
        %355 = vmatprep.subr.mxu0 0.0
        %356 = vmatpush1.msra.mxu0 %v256
        %357 = vmatprep.subr.mxu0 0.0
        %358 = vmatpush1.msra.mxu0 0.0
        %359 = vmatprep.subr.mxu0 0.0
        %360 = vmatpush1.msra.mxu0 0.0
        %361 = vmatprep.subr.mxu0 0.0
        %362 = vmatpush1.msra.mxu0 0.0
        %363 = vmatprep.subr.mxu0 0.0
        %364 = vmatpush1.msra.mxu0 0.0
        %365 = vmatprep.subr.mxu0 0.0
        %366 = vmatpush1.msra.mxu0 0.0
        %367 = vmatprep.subr.mxu0 0.0
        %368 = vmatpush1.msra.mxu0 0.0
        %369 = vmatprep.subr.mxu0 0.0
        %370 = vmatpush1.msra.mxu0 0.0
        %371 = vmatprep.subr.mxu0 0.0
        %372 = vmatpush1.msra.mxu0 0.0
        %373 = vmatprep.subr.mxu0 0.0
        %374 = vmatpush1.msra.mxu0 0.0
        %375 = vmatprep.subr.mxu0 0.0
        %376 = vmatpush1.msra.mxu0 0.0
        %377 = vmatprep.subr.mxu0 0.0
        %378 = vmatpush1.msra.mxu0 0.0
        %379 = vmatprep.subr.mxu0 0.0
        %380 = vmatpush1.msra.mxu0 0.0
        %381 = vmatprep.subr.mxu0 0.0
        %382 = vmatpush1.msra.mxu0 0.0
        %383 = vmatprep.subr.mxu0 0.0
        %384 = vmatpush1.msra.mxu0 0.0
        %385 = vmatprep.subr.mxu0 0.0
        %386 = vmatpush1.msra.mxu0 0.0
        %387 = vmatprep.subr.mxu0 0.0
        %388 = vmatpush1.msra.mxu0 0.0
        %389 = vmatprep.subr.mxu0 0.0
        %390 = vmatpush1.msra.mxu0 0.0
        %391 = vmatprep.subr.mxu0 0.0
        %392 = vmatpush1.msra.mxu0 0.0
        %393 = vmatprep.subr.mxu0 0.0
        %394 = vmatpush1.msra.mxu0 0.0
        %395 = vmatprep.subr.mxu0 0.0
        %396 = vmatpush1.msra.mxu0 0.0
        %397 = vmatprep.subr.mxu0 0.0
        %398 = vmatpush1.msra.mxu0 0.0
        %399 = vmatprep.subr.mxu0 0.0
        %400 = vmatpush1.msra.mxu0 0.0
        %401 = vmatprep.subr.mxu0 0.0
        %402 = vmatpush1.msra.mxu0 0.0
        %403 = vmatprep.subr.mxu0 0.0
        %404 = vmatpush1.msra.mxu0 0.0
        %405 = vmatprep.subr.mxu0 0.0
        %406 = vmatpush1.msra.mxu0 0.0
        %407 = vmatprep.subr.mxu0 0.0
        %408 = vmatpush1.msra.mxu0 0.0
        %409 = vmatprep.subr.mxu0 0.0
        %410 = vmatpush1.msra.mxu0 0.0
        %411 = vmatprep.subr.mxu0 0.0
        %412 = vmatpush1.msra.mxu0 0.0
        %413 = vmatprep.mubr.f32.mxu0 0.0
        %414 = vmatmul.mubr.f32.gmra.mrb[0].mxu0 %v344
        %v415 = vpop.f32.mrb[0].mxu0
        %v416 = vadd.f32 0.0, %v415
        %v417 = vpop.f32.mrb[0].mxu0
        %418 = vmatprep.mubr.f32.mxu0 0.0
        %419 = vmatmul.mubr.f32.gmra.mrb[0].mxu0 %v347
        %v420 = vpop.f32.mrb[0].mxu0
        %v421 = vadd.f32 0.0, %v420
        %v422 = vpop.f32.mrb[0].mxu0
        %423 = vdwg.mxu0
        %v424 = vmul.f32 %v241, %v416
        %v425 = vmul.f32 %v242, %v421
        %426 = vadd.xlane.f32.xlu0 %v424
        %v427 = vpop.xlane.xlu0 %426
        %428 = vadd.xlane.f32.xlu0 %v425
        %v429 = vpop.xlane.xlu0 %428
        %v430 = vmax.f32 %v427, 1e-30
        %v431 = vmax.f32 %v429, 1e-30
        %v432 = vlog2.pop %v430
        %v433 = vmul.f32 %v432, 0.6931472
        %v434 = vlog2.pop %v431
        %v435 = vmul.f32 %v434, 0.6931472
        %v436 = vadd.f32 %v321, %v433
        %v437 = vadd.f32 %v324, %v435
        %v438 = vsub.f32 %v341, %v243
        %v439 = vsub.f32 %v342, %v244
        %vm440 = vcmask 7168
        %v441 = vsel %vm440, %v438, 0.0
        %v442 = vsel %vm440, %v439, 0.0
        %v443 = vadd.f32 %v441, %v442
        %v444 = vrot.slane %v443, 4
        %v445 = vadd.f32 %v443, %v444
        %v446 = vrot.slane %v445, 2
        %v447 = vadd.f32 %v445, %v446
        %v448 = vrot.slane %v447, 1
        %v449 = vadd.f32 %v447, %v448
        %v450 = vsub.f32 %v436, %v243
        %v451 = vsub.f32 %v437, %v244
        %453 = vset.pattern.permute.xlu0 0
        %454 = vperm.xlu0 %453, %v450
        %v455 = vpop.permute.xlu0 %454
        %458 = vset.pattern.permute.xlu0 0
        %459 = vperm.xlu0 %458, %v451
        %v460 = vpop.permute.xlu0 %459
        %v462 = vmul.f32 %v241, %v455
        %v463 = vmul.f32 %v242, %v460
        %v464 = vadd.f32 %v462, %v463
        %v465 = vrot.slane %v464, 4
        %v466 = vadd.f32 %v464, %v465
        %v467 = vrot.slane %v466, 2
        %v468 = vadd.f32 %v466, %v467
        %v469 = vrot.slane %v468, 1
        %v470 = vadd.f32 %v468, %v469
        %v473 = vunpack.c.l.b16 %v238
        %v474 = vunpack.c.l.b16 %v239
        %v475 = vpack.c.b16 %v474, %v473
        %v481 = vunpack.c.l.b16 %v245
        %v482 = vunpack.c.l.b16 %v246
        %v483 = vunpack.c.l.b16 %v247
        %v484 = vunpack.c.l.b16 %v248
        %v485 = vpack.c.b16 %v482, %v481
        %v486 = vpack.c.b16 %v484, %v483
        %489 = vmatprep.subr.bf16.mxu0 0
        %490 = vmatpush1.bf16.xpose.msra.mxu0 %v485
        %491 = vmatprep.subr.bf16.mxu0 0
        %492 = vmatpush1.bf16.xpose.msra.mxu0 %v486
        %493 = vmatprep.subr.bf16.mxu0 0
        %494 = vmatpush1.bf16.xpose.msra.mxu0 0
        %495 = vmatprep.subr.bf16.mxu0 0
        %496 = vmatpush1.bf16.xpose.msra.mxu0 0
        %497 = vmatprep.subr.bf16.mxu0 0
        %498 = vmatpush1.bf16.xpose.msra.mxu0 0
        %499 = vmatprep.subr.bf16.mxu0 0
        %500 = vmatpush1.bf16.xpose.msra.mxu0 0
        %501 = vmatprep.subr.bf16.mxu0 0
        %502 = vmatpush1.bf16.xpose.msra.mxu0 0
        %503 = vmatprep.subr.bf16.mxu0 0
        %504 = vmatpush1.bf16.xpose.msra.mxu0 0
        %505 = vmatprep.subr.bf16.mxu0 0
        %506 = vmatpush1.bf16.xpose.msra.mxu0 0
        %507 = vmatprep.subr.bf16.mxu0 0
        %508 = vmatpush1.bf16.xpose.msra.mxu0 0
        %509 = vmatprep.subr.bf16.mxu0 0
        %510 = vmatpush1.bf16.xpose.msra.mxu0 0
        %511 = vmatprep.subr.bf16.mxu0 0
        %512 = vmatpush1.bf16.xpose.msra.mxu0 0
        %513 = vmatprep.subr.bf16.mxu0 0
        %514 = vmatpush1.bf16.xpose.msra.mxu0 0
        %515 = vmatprep.subr.bf16.mxu0 0
        %516 = vmatpush1.bf16.xpose.msra.mxu0 0
        %517 = vmatprep.subr.bf16.mxu0 0
        %518 = vmatpush1.bf16.xpose.msra.mxu0 0
        %519 = vmatprep.subr.bf16.mxu0 0
        %520 = vmatpush1.bf16.xpose.msra.mxu0 0
        %521 = vmatprep.mubr.bf16.mxu0 0
        %522 = vmatmul.mubr.bf16.gmra.mrb[0].mxu0 %v475
        %v523 = vpop.f32.mrb[0].mxu0
        %v524 = vadd.f32 0.0, %v523
        %v525 = vpop.f32.mrb[0].mxu0
        %v526 = vpop.f32.mrb[0].mxu0
        %v527 = vadd.f32 0.0, %v526
        %v528 = vpop.f32.mrb[0].mxu0
        %529 = vdwg.mxu0
        %v530 = vmul.f32 %v524, 14.285714
        %v531 = vmul.f32 %v527, 14.285714
        %v532 = vsel %vm318, %v530, -inf
        %533 = vmax.xlane.f32.xlu0 %v532
        %v534 = vpop.xlane.xlu0 %533
        %v535 = vsel %vm318, %v531, -inf
        %536 = vmax.xlane.f32.xlu0 %v535
        %v537 = vpop.xlane.xlu0 %536
        %v538 = vsub.f32 %v530, %v534
        %v539 = vsub.f32 %v531, %v537
        %v540 = vmul.f32 %v538, 1.442695
        %v541 = vpow.pop %v540
        %v542 = vmul.f32 %v539, 1.442695
        %v543 = vpow.pop %v542
        %v544 = vsel %vm318, %v541, 0.0
        %545 = vadd.xlane.f32.xlu0 %v544
        %v546 = vpop.xlane.xlu0 %545
        %v547 = vsel %vm318, %v543, 0.0
        %548 = vadd.xlane.f32.xlu0 %v547
        %v549 = vpop.xlane.xlu0 %548
        %v550 = vlog2.pop %v546
        %v551 = vmul.f32 %v550, 0.6931472
        %v552 = vlog2.pop %v549
        %v553 = vmul.f32 %v552, 0.6931472
        %v554 = vadd.f32 %v534, %v551
        %v555 = vadd.f32 %v537, %v553
        %v557 = vsel %vm318, %v541, 0
        %v560 = vsel %vm318, %v543, 0
        %562 = vmatprep.subr.mxu0 0.0
        %563 = vmatpush1.msra.mxu0 %v253
        %564 = vmatprep.subr.mxu0 0.0
        %565 = vmatpush1.msra.mxu0 %v254
        %566 = vmatprep.subr.mxu0 0.0
        %567 = vmatpush1.msra.mxu0 %v255
        %568 = vmatprep.subr.mxu0 0.0
        %569 = vmatpush1.msra.mxu0 %v256
        %570 = vmatprep.subr.mxu0 0.0
        %571 = vmatpush1.msra.mxu0 0.0
        %572 = vmatprep.subr.mxu0 0.0
        %573 = vmatpush1.msra.mxu0 0.0
        %574 = vmatprep.subr.mxu0 0.0
        %575 = vmatpush1.msra.mxu0 0.0
        %576 = vmatprep.subr.mxu0 0.0
        %577 = vmatpush1.msra.mxu0 0.0
        %578 = vmatprep.subr.mxu0 0.0
        %579 = vmatpush1.msra.mxu0 0.0
        %580 = vmatprep.subr.mxu0 0.0
        %581 = vmatpush1.msra.mxu0 0.0
        %582 = vmatprep.subr.mxu0 0.0
        %583 = vmatpush1.msra.mxu0 0.0
        %584 = vmatprep.subr.mxu0 0.0
        %585 = vmatpush1.msra.mxu0 0.0
        %586 = vmatprep.subr.mxu0 0.0
        %587 = vmatpush1.msra.mxu0 0.0
        %588 = vmatprep.subr.mxu0 0.0
        %589 = vmatpush1.msra.mxu0 0.0
        %590 = vmatprep.subr.mxu0 0.0
        %591 = vmatpush1.msra.mxu0 0.0
        %592 = vmatprep.subr.mxu0 0.0
        %593 = vmatpush1.msra.mxu0 0.0
        %594 = vmatprep.subr.mxu0 0.0
        %595 = vmatpush1.msra.mxu0 0.0
        %596 = vmatprep.subr.mxu0 0.0
        %597 = vmatpush1.msra.mxu0 0.0
        %598 = vmatprep.subr.mxu0 0.0
        %599 = vmatpush1.msra.mxu0 0.0
        %600 = vmatprep.subr.mxu0 0.0
        %601 = vmatpush1.msra.mxu0 0.0
        %602 = vmatprep.subr.mxu0 0.0
        %603 = vmatpush1.msra.mxu0 0.0
        %604 = vmatprep.subr.mxu0 0.0
        %605 = vmatpush1.msra.mxu0 0.0
        %606 = vmatprep.subr.mxu0 0.0
        %607 = vmatpush1.msra.mxu0 0.0
        %608 = vmatprep.subr.mxu0 0.0
        %609 = vmatpush1.msra.mxu0 0.0
        %610 = vmatprep.subr.mxu0 0.0
        %611 = vmatpush1.msra.mxu0 0.0
        %612 = vmatprep.subr.mxu0 0.0
        %613 = vmatpush1.msra.mxu0 0.0
        %614 = vmatprep.subr.mxu0 0.0
        %615 = vmatpush1.msra.mxu0 0.0
        %616 = vmatprep.subr.mxu0 0.0
        %617 = vmatpush1.msra.mxu0 0.0
        %618 = vmatprep.subr.mxu0 0.0
        %619 = vmatpush1.msra.mxu0 0.0
        %620 = vmatprep.subr.mxu0 0.0
        %621 = vmatpush1.msra.mxu0 0.0
        %622 = vmatprep.subr.mxu0 0.0
        %623 = vmatpush1.msra.mxu0 0.0
        %624 = vmatprep.subr.mxu0 0.0
        %625 = vmatpush1.msra.mxu0 0.0
        %626 = vmatprep.mubr.f32.mxu0 0.0
        %627 = vmatmul.mubr.f32.gmra.mrb[0].mxu0 %v557
        %v628 = vpop.f32.mrb[0].mxu0
        %v629 = vadd.f32 0.0, %v628
        %v630 = vpop.f32.mrb[0].mxu0
        %631 = vmatprep.mubr.f32.mxu0 0.0
        %632 = vmatmul.mubr.f32.gmra.mrb[0].mxu0 %v560
        %v633 = vpop.f32.mrb[0].mxu0
        %v634 = vadd.f32 0.0, %v633
        %v635 = vpop.f32.mrb[0].mxu0
        %636 = vdwg.mxu0
        %v637 = vmul.f32 %v241, %v629
        %v638 = vmul.f32 %v242, %v634
        %639 = vadd.xlane.f32.xlu0 %v637
        %v640 = vpop.xlane.xlu0 %639
        %641 = vadd.xlane.f32.xlu0 %v638
        %v642 = vpop.xlane.xlu0 %641
        %v643 = vmax.f32 %v640, 1e-30
        %v644 = vmax.f32 %v642, 1e-30
        %v645 = vlog2.pop %v643
        %v646 = vmul.f32 %v645, 0.6931472
        %v647 = vlog2.pop %v644
        %v648 = vmul.f32 %v647, 0.6931472
        %v649 = vadd.f32 %v534, %v646
        %v650 = vadd.f32 %v537, %v648
        %v651 = vsub.f32 %v554, %v243
        %v652 = vsub.f32 %v555, %v244
        %v653 = vsel %vm440, %v651, 0.0
        %v654 = vsel %vm440, %v652, 0.0
        %v655 = vadd.f32 %v653, %v654
        %v656 = vrot.slane %v655, 4
        %v657 = vadd.f32 %v655, %v656
        %v658 = vrot.slane %v657, 2
        %v659 = vadd.f32 %v657, %v658
        %v660 = vrot.slane %v659, 1
        %v661 = vadd.f32 %v659, %v660
        %v662 = vsub.f32 %v649, %v243
        %v663 = vsub.f32 %v650, %v244
        %665 = vset.pattern.permute.xlu0 0
        %666 = vperm.xlu0 %665, %v662
        %v667 = vpop.permute.xlu0 %666
        %670 = vset.pattern.permute.xlu0 0
        %671 = vperm.xlu0 %670, %v663
        %v672 = vpop.permute.xlu0 %671
        %v674 = vmul.f32 %v241, %v667
        %v675 = vmul.f32 %v242, %v672
        %v676 = vadd.f32 %v674, %v675
        %v677 = vrot.slane %v676, 4
        %v678 = vadd.f32 %v676, %v677
        %v679 = vrot.slane %v678, 2
        %v680 = vadd.f32 %v678, %v679
        %v681 = vrot.slane %v680, 1
        %v682 = vadd.f32 %v680, %v681
        %v683 = vlaneseq
        %v684 = vshrl.u32 %v683, 7
        %v685 = vlaneseq
        %v686 = vand.u32 %v685, 127
        %vm687 = vcmp.eq.s32.totalorder %v684, 0
        %vm688 = vcmp.eq.s32.totalorder %v686, 0
        %vm689 = vmand %vm687, %vm688
        %691 = vset.pattern.permute.xlu0 0
        %692 = vperm.xlu0 %691, %v449
        %v693 = vpop.permute.xlu0 %692
        %v695 = vsel %vm689, %v693, 0.0
        %vm696 = vcmp.eq.s32.totalorder %v686, 1
        %vm697 = vmand %vm687, %vm696
        %699 = vset.pattern.permute.xlu0 0
        %700 = vperm.xlu0 %699, %v661
        %v701 = vpop.permute.xlu0 %700
        %v703 = vsel %vm697, %v701, 0.0
        %v704 = vadd.f32 %v695, %v703
        %vm705 = vcmp.eq.s32.totalorder %v684, 1
        %v706 = vsel %vm705, %v470, 0.0
        %v707 = vadd.f32 %v704, %v706
        %vm708 = vcmp.eq.s32.totalorder %v684, 2
        %v709 = vsel %vm708, %v682, 0.0
        %v710 = vadd.f32 %v707, %v709
        %711 = vst [vmem:[%s221] sm:$0xff] %v710
        %s712 = sand.u32 %s117, 1
        %s713 = scalar_lea.sflag [#allocation4], %s712
        %s714 = sand.u32 %s117, 1
        %s715 = smul.addr %s714, 8
        %s716 = scalar_lea.vmem [#allocation7], %s715
        // Predicated region
        $region45: #{tpu_custom_call.1} parent=35 // pred_check
          %p717 = pneg %p127
        $region46: #{tpu_custom_call.1} parent=35 // pred_check_branch
          %719 = sbr.rel (%p717) target = $region48
        $region47: #{tpu_custom_call.1} parent=35 // pred_region
          %s721 = ssub.s32 128, 128
          %722 = vsyncadd %s713, %s721
          %s723 = smul.addr %s20, 128
          %s724 = scalar_lea.hbm %s4, %s723
          %s726 = sshll.u32 %s716, 4
          %s727 = int_to_ptr.vmem [resolvable:$true] %s726
          %729 = dma.vmem_to_hbm [thread:$0]  %s727, 128, %s724, %s713
        $region48: #{tpu_custom_call.1} parent=35 // pred_fallthru
          _
      $region36: #{tpu_custom_call.1} parent=5 // pred_fallthru
        _
      %p730 = scmp.le.s32.totalorder 2, %s15
      // Predicated region
      $region49: #{tpu_custom_call.1} parent=5 // pred_check
        %p731 = pneg %p730
      $region50: #{tpu_custom_call.1} parent=5 // pred_check_branch
        %733 = sbr.rel (%p731) target = $region52
      $region51: #{tpu_custom_call.1} parent=5 // pred_region
        %s734 = ssub.s32 %s15, 2
        // Predicated region
        $region53: #{tpu_custom_call.1} parent=51 // pred_check
          %p735 = pneg %p133
        $region54: #{tpu_custom_call.1} parent=51 // pred_check_branch
          %737 = sbr.rel (%p735) target = $region56
        $region55: #{tpu_custom_call.1} parent=51 // pred_region
          %s738 = sand.u32 %s118, 1
          %s739 = scalar_lea.sflag [#allocation4], %s738
          %s740 = sand.u32 %s118, 1
          %s741 = smul.addr %s740, 8
          %s742 = scalar_lea.vmem [#allocation7], %s741
          %743 = dma.done %s739, 128
        $region56: #{tpu_custom_call.1} parent=51 // pred_fallthru
          _
      $region52: #{tpu_custom_call.1} parent=5 // pred_fallthru
        _
    $region6: #{tpu_custom_call.1} parent=1 // loop_footer
      %s19 = sadd.s32 1, %s15
    $region7: #{tpu_custom_call.1} parent=1 // loop_footer_branch
      %14 = sbr.rel target = $region3
    $region8: #{tpu_custom_call.1} parent=1 // loop_exit
      _
    %744 = vsyncpa [#allocation3], 1
    %s745 = scalar_lea.sflag [#allocation3], 1
    %746 = vsyncpa %s745, 1
    %747 = vsyncpa [#allocation6], 1
    %748 = vsyncpa [#allocation4], 1
    %s749 = scalar_lea.sflag [#allocation4], 1
    %750 = vsyncpa %s749, 1

</llo_original>
